<compile_context>
chip_gen: v5e
topology: v5e:2x2
jax: 0.10.0
libtpu: 0.0.40
codegen_flags: <defaults>
</compile_context>

<pallas_src>
import functools

import jax
import jax.numpy as jnp
from jax.experimental import pallas as pl
from jax.experimental.pallas import tpu as pltpu


def _mel_l1_kernel(a_ref, b_ref, out_ref, *, chunk, valid_cols, needs_mask):
    """Accumulates sum(|a - b|) over valid columns into the (B, 1) output."""
    i = pl.program_id(0)

    @pl.when(i == 0)
    def _():
        out_ref[...] = jnp.zeros_like(out_ref)

    # Native-dtype difference (bf16 stays bf16); widen only for the reduce.
    d = jnp.abs(a_ref[...] - b_ref[...]).astype(jnp.float32)

    if needs_mask:
        # Only the final chunk can extend past valid_cols; every interior
        # chunk takes the unmasked fast path (3 VPU ops/element).
        is_tail = i == pl.num_programs(0) - 1

        @pl.when(jnp.logical_not(is_tail))
        def _():
            out_ref[...] += jnp.sum(d, axis=-1, keepdims=True)

        @pl.when(is_tail)
        def _():
            col = i * chunk + jax.lax.broadcasted_iota(jnp.int32, d.shape, 1)
            dm = jnp.where(col < valid_cols, d, 0.0)
            out_ref[...] += jnp.sum(dm, axis=-1, keepdims=True)
    else:
        out_ref[...] += jnp.sum(d, axis=-1, keepdims=True)


def tts_loss(mel_output, mel_target, duration_pred, duration_target):
    """Pallas equivalent of TTSLoss.forward (returns a scalar f32)."""
    B, Tp, M = mel_output.shape
    Bt, Tt, Mt = mel_target.shape
    assert Bt == B and Mt == M, "batch / mel-bin dims must match"

    min_len = min(Tp, Tt)
    valid_cols = min_len * M             # valid flattened columns per batch row
    mel_count = B * valid_cols           # denominator of the mean-reduced L1

    # Free, contiguous reshapes -- no data movement, no min_len slice copy.
    a2 = mel_output.reshape(B, Tp * M)
    b2 = mel_target.reshape(B, Tt * M)

    # ---- block sizing: ~4 MiB per input buffer, lane-dense ----------------
    b_pad = ((B + 7) // 8) * 8           # sublane padding of VMEM buffers
    in_bytes = max(jnp.dtype(mel_output.dtype).itemsize,
                   jnp.dtype(mel_target.dtype).itemsize)
    target_block_bytes = 4 * 1024 * 1024

    if valid_cols >= 128:
        chunk = (target_block_bytes // (b_pad * in_bytes)) // 128 * 128
        chunk = max(chunk, 128)
        chunk = min(chunk, (valid_cols // 128) * 128)   # lane-dense, <= valid
    else:
        # Tiny-sequence fallback: slice (negligible data) so the full-extent
        # block shape is layout-legal.
        a2 = a2[:, :valid_cols]
        b2 = b2[:, :valid_cols]
        chunk = valid_cols

    n_chunks = -(-valid_cols // chunk)
    needs_mask = (valid_cols % chunk) != 0   # static: mask only if ragged tail

    kernel = functools.partial(_mel_l1_kernel, chunk=chunk,
                               valid_cols=valid_cols, needs_mask=needs_mask)

    row_sums = pl.pallas_call(
        kernel,
        out_shape=jax.ShapeDtypeStruct((B, 1), jnp.float32),
        grid_spec=pltpu.PrefetchScalarGridSpec(
            num_scalar_prefetch=0,
            grid=(n_chunks,),
            in_specs=[
                pl.BlockSpec((B, chunk), lambda i: (0, i)),   # mel_output
                pl.BlockSpec((B, chunk), lambda i: (0, i)),   # mel_target
            ],
            out_specs=pl.BlockSpec((B, 1), lambda i: (0, 0)),
        ),
        compiler_params=pltpu.CompilerParams(
            dimension_semantics=("arbitrary",),
            vmem_limit_bytes=48 * 1024 * 1024),
    )(a2, b2)

    mel_loss = jnp.sum(row_sums) / jnp.float32(mel_count)

    # Duration MSE: tiny (B, Tdur) arrays -- plain JAX (per perf review),
    # matching nn.MSELoss on .float() inputs.
    dd = duration_pred.astype(jnp.float32) - duration_target.astype(jnp.float32)
    dur_loss = jnp.mean(dd * dd)

    return mel_loss + dur_loss


def _reference(mel_output, mel_target, duration_pred, duration_target):
    min_len = min(mel_output.shape[1], mel_target.shape[1])
    a = mel_output[:, :min_len, :].astype(jnp.float32)
    b = mel_target[:, :min_len, :].astype(jnp.float32)
    mel_loss = jnp.mean(jnp.abs(a - b))
    dd = duration_pred.astype(jnp.float32) - duration_target.astype(jnp.float32)
    dur_loss = jnp.mean(dd * dd)
    return mel_loss + dur_loss


if __name__ == "__main__":
    key = jax.random.PRNGKey(0)

    # Case 1: Tp != Tt, valid_cols a multiple of 128 (fast unmasked path).
    k1, k2, k3, k4, key = jax.random.split(key, 5)
    B, Tp, Tt, M, Tdur = 2, 18, 16, 32, 8
    mel_output = jax.random.normal(k1, (B, Tp, M), dtype=jnp.float32)
    mel_target = jax.random.normal(k2, (B, Tt, M), dtype=jnp.float32)
    duration_pred = jax.random.normal(k3, (B, Tdur), dtype=jnp.float32)
    duration_target = jax.random.randint(k4, (B, Tdur), 0, 10).astype(jnp.float32)

    loss = tts_loss(mel_output, mel_target, duration_pred, duration_target)
    loss = jax.block_until_ready(loss)
    ref = _reference(mel_output, mel_target, duration_pred, duration_target)
    assert jnp.allclose(loss, ref, rtol=1e-5, atol=1e-5), (loss, ref)

    # Case 2: Tp != Tt and valid_cols NOT a multiple of 128 / of the chunk
    # (exercises the masked tail chunk + padded edge-block read).
    k1, k2, k3, k4, key = jax.random.split(key, 5)
    B2, Tp2, Tt2, M2, Tdur2 = 2, 13, 11, 40, 5
    mo2 = jax.random.normal(k1, (B2, Tp2, M2), dtype=jnp.float32)
    mt2 = jax.random.normal(k2, (B2, Tt2, M2), dtype=jnp.float32)
    dp2 = jax.random.normal(k3, (B2, Tdur2), dtype=jnp.float32)
    dt2 = jax.random.randint(k4, (B2, Tdur2), 0, 10).astype(jnp.float32)

    loss2 = tts_loss(mo2, mt2, dp2, dt2)
    loss2 = jax.block_until_ready(loss2)
    ref2 = _reference(mo2, mt2, dp2, dt2)
    assert jnp.allclose(loss2, ref2, rtol=1e-5, atol=1e-5), (loss2, ref2)

    print("KERNEL_OK")
</pallas_src>

<mosaic_0001>
module attributes {stable_mosaic.version = 11 : i64} {
  func.func @_mel_l1_kernel(%arg0: i32, %arg1: memref<2x512xf32, #tpu.memory_space<vmem>>, %arg2: memref<2x512xf32, #tpu.memory_space<vmem>>, %arg3: memref<2x1xf32, #tpu.memory_space<vmem>>) attributes {dimension_semantics = [#tpu.dimension_semantics<arbitrary>], iteration_bounds = array<i64: 1>, scalar_prefetch = 0 : i64, scratch_operands = 0 : i64, tpu.core_type = #tpu.core_type<tc>, window_params = [{transform_indices = @transform_0, window_bounds = array<i64: 2, 512>}, {transform_indices = @transform_1, window_bounds = array<i64: 2, 512>}, {pipeline_mode = #tpu.pipeline_mode<synchronous>, transform_indices = @transform_2, window_bounds = array<i64: 2, 1>}]} {
    %c0_i32 = arith.constant 0 : i32
    %0 = arith.cmpi eq, %arg0, %c0_i32 : i32
    %1 = arith.extui %0 : i1 to i32
    %c0_i32_0 = arith.constant 0 : i32
    %2 = arith.cmpi ne, %1, %c0_i32_0 : i32
    scf.if %2 {
      %cst_8 = arith.constant 0.000000e+00 : f32
      %12 = vector.broadcast %cst_8 : f32 to vector<2x1xf32>
      %c0_9 = arith.constant 0 : index
      %c0_10 = arith.constant 0 : index
      %13 = vector.load %arg3[%c0_9, %c0_10] : memref<2x1xf32, #tpu.memory_space<vmem>>, vector<2x1xf32>
      tpu.vector_store %arg3[%c0_9, %c0_10], %12 {strides = array<i32>} : memref<2x1xf32, #tpu.memory_space<vmem>>, vector<2x1xf32>,
    } else {
    }
    %c0 = arith.constant 0 : index
    %c0_1 = arith.constant 0 : index
    %3 = vector.load %arg1[%c0, %c0_1] : memref<2x512xf32, #tpu.memory_space<vmem>>, vector<2x512xf32>
    %c0_2 = arith.constant 0 : index
    %c0_3 = arith.constant 0 : index
    %4 = vector.load %arg2[%c0_2, %c0_3] : memref<2x512xf32, #tpu.memory_space<vmem>>, vector<2x512xf32>
    %5 = arith.subf %3, %4 : vector<2x512xf32>
    %6 = math.absf %5 : vector<2x512xf32>
    %c0_4 = arith.constant 0 : index
    %c0_5 = arith.constant 0 : index
    %7 = vector.load %arg3[%c0_4, %c0_5] : memref<2x1xf32, #tpu.memory_space<vmem>>, vector<2x1xf32>
    %cst = arith.constant dense<0.000000e+00> : vector<2xf32>
    %8 = vector.multi_reduction <add>, %6, %cst [1] : vector<2x512xf32> to vector<2xf32>
    %9 = vector.shape_cast %8 : vector<2xf32> to vector<2x1xf32>
    %10 = arith.addf %7, %9 : vector<2x1xf32>
    %c0_6 = arith.constant 0 : index
    %c0_7 = arith.constant 0 : index
    %11 = vector.load %arg3[%c0_6, %c0_7] : memref<2x1xf32, #tpu.memory_space<vmem>>, vector<2x1xf32>
    tpu.vector_store %arg3[%c0_6, %c0_7], %10 {strides = array<i32>} : memref<2x1xf32, #tpu.memory_space<vmem>>, vector<2x1xf32>,
    return
  }
  func.func @transform_0(%arg0: i32) -> (i32, i32) {
    %c0_i32 = arith.constant 0 : i32
    %c0_i32_0 = arith.constant 0 : i32
    return %c0_i32, %arg0 : i32, i32
  }
  func.func @transform_1(%arg0: i32) -> (i32, i32) {
    %c0_i32 = arith.constant 0 : i32
    %c0_i32_0 = arith.constant 0 : i32
    return %c0_i32, %arg0 : i32, i32
  }
  func.func @transform_2(%arg0: i32) -> (i32, i32) {
    %c0_i32 = arith.constant 0 : i32
    %c0_i32_0 = arith.constant 0 : i32
    %c0_i32_1 = arith.constant 0 : i32
    return %c0_i32, %c0_i32_0 : i32, i32
  }
}

</mosaic_0001>

<llo_original>
// kernel: tpu_custom_call.1
$region0: #{tpu_custom_call.1}
  #allocation0 [shape = 'u32[]', space=smem, size = 0x4, offset = 0x4, fixed_abs, tag = 'smem constant byte address 0x4 - core index']
  #allocation1 [shape = 'u32[72,128]{1,0:T(1,128)}', space=vmem, size = 0x9000, scoped, tag = 'internal scratch']
  %s0 = inlined_call_operand.hbm [shape: f32[2,576], index: 0, kind: input, shape index: {}]
  %s1 = inlined_call_operand.hbm [shape: f32[2,512], index: 1, kind: input, shape index: {}]
  %s2 = inlined_call_operand.vmem [shape: f32[2,1], index: 2, kind: output, shape index: {}]
  %s3 = sld [smem:[#allocation0]]
  $region30: #{tpu_custom_call.1} parent=0
    _
  %s5 = ssub.s32 1, %s3
  %s6 = scalar_select 0, %s5, %s3
  $region1: #{tpu_custom_call.1} parent=0
    #allocation2 [shape = 'u8[4096]{0}', space=vmem, size = 0x1000, scoped, tag = 'input window, operand 0, single buffered']
    #allocation3 [shape = 's32[1]{0}', space=sflag, size = 0x4, scoped, tag = 'scoped memory for tpu_custom_call.1']
    #allocation4 [shape = 'u8[4096]{0}', space=vmem, size = 0x1000, scoped, tag = 'input window, operand 1, single buffered']
    #allocation5 [shape = 's32[1]{0}', space=sflag, size = 0x4, scoped, tag = 'scoped memory for tpu_custom_call.1']
    %7 = vsyncpa [#allocation3], 0
    %8 = vsyncpa [#allocation5], 0
    // Predicated region
    $region2: #{tpu_custom_call.1} parent=1 // pred_check
      _
    $region3: #{tpu_custom_call.1} parent=1 // pred_check_branch
      %10 = sbr.rel (0) target = $region5
    $region4: #{tpu_custom_call.1} parent=1 // pred_region
      %12 = vsyncadd [#allocation3], 0
      %s14 = sshll.u32 %s0, 4
      %s15 = int_to_ptr.hbm [resolvable:$true] %s14
      %s16 = sshll.u32 [#allocation2], 4
      %s17 = int_to_ptr.vmem [resolvable:$true] %s16
      %19 = dma.hbm_to_vmem [thread:$0]  %s15, 128, %s17, [#allocation3]
    $region5: #{tpu_custom_call.1} parent=1 // pred_fallthru
      _
    // Predicated region
    $region6: #{tpu_custom_call.1} parent=1 // pred_check
      _
    $region7: #{tpu_custom_call.1} parent=1 // pred_check_branch
      %21 = sbr.rel (0) target = $region9
    $region8: #{tpu_custom_call.1} parent=1 // pred_region
      %23 = vsyncadd [#allocation5], 0
      %s25 = sshll.u32 %s1, 4
      %s26 = int_to_ptr.hbm [resolvable:$true] %s25
      %s27 = sshll.u32 [#allocation4], 4
      %s28 = int_to_ptr.vmem [resolvable:$true] %s27
      %30 = dma.hbm_to_vmem [thread:$0]  %s26, 128, %s28, [#allocation5]
    $region9: #{tpu_custom_call.1} parent=1 // pred_fallthru
      _
    // Predicated region
    $region10: #{tpu_custom_call.1} parent=1 // pred_check
      _
    $region11: #{tpu_custom_call.1} parent=1 // pred_check_branch
      %32 = sbr.rel (0) target = $region13
    $region12: #{tpu_custom_call.1} parent=1 // pred_region
      %34 = dma.done [#allocation3], 128
    $region13: #{tpu_custom_call.1} parent=1 // pred_fallthru
      _
    // Predicated region
    $region14: #{tpu_custom_call.1} parent=1 // pred_check
      _
    $region15: #{tpu_custom_call.1} parent=1 // pred_check_branch
      %36 = sbr.rel (0) target = $region17
    $region16: #{tpu_custom_call.1} parent=1 // pred_region
      %38 = dma.done [#allocation5], 128
    $region17: #{tpu_custom_call.1} parent=1 // pred_fallthru
      _
    %p39 = scmp.eq.s32.totalorder 0, 0
    // Predicated region
    $region18: #{tpu_custom_call.1} parent=1 // pred_check
      %p40 = pneg %p39
    $region19: #{tpu_custom_call.1} parent=1 // pred_check_branch
      %42 = sbr.rel (%p40) target = $region21
    $region20: #{tpu_custom_call.1} parent=1 // pred_region
      %vm43 = vcmask 1024
      %44 = vst.msk [vmem:[%s2] sm:$0x3] %vm43, 0.0
    $region21: #{tpu_custom_call.1} parent=1 // pred_fallthru
      _
    %v45 = vld [vmem:[#allocation2] sm:$0xff]
    %v46 = vld [vmem:[#allocation4] sm:$0xff]
    %v47 = vsub.f32 %v45, %v46
    %v48 = vand.u32 2147483647, %v47
    %v49 = vld [vmem:[%s2] sm:$0x3]
    %51 = vst [vmem:[#allocation1] ss:$4 sm:$0xff] %v48
    %v52 = vld.sshfl [vmem:[#allocation1] sm:$0xff pattern:$0x73625140]
    %v53 = vld.sshfl [vmem:[#allocation1 + $0x8] sm:$0xff pattern:$0x73625140]
    %v54 = vld.sshfl [vmem:[#allocation1 + $0x10] sm:$0xff pattern:$0x73625140]
    %v55 = vld.sshfl [vmem:[#allocation1 + $0x18] sm:$0xff pattern:$0x73625140]
    %vm60 = vcmask 1041408
    %v61 = vsel %vm60, %v52, 0.0
    %v62 = vsel %vm60, %v53, 0.0
    %v63 = vadd.f32 %v61, %v62
    %v64 = vsel %vm60, %v54, 0.0
    %v65 = vadd.f32 %v63, %v64
    %v66 = vsel %vm60, %v55, 0.0
    %v67 = vadd.f32 %v65, %v66
    %68 = vadd.xlane.f32.xlu0 %v67
    %v69 = vpop.xlane.xlu0 %68
    %v70 = vadd.f32 %v49, %v69
    %vm71 = vcmask 1024
    %72 = vst.msk [vmem:[%s2] sm:$0x3] %vm71, %v70
    // Predicated region
    $region22: #{tpu_custom_call.1} parent=1 // pred_check
      _
    $region23: #{tpu_custom_call.1} parent=1 // pred_check_branch
      %74 = sbr.rel (0) target = $region25
    $region24: #{tpu_custom_call.1} parent=1 // pred_region
      _
    $region25: #{tpu_custom_call.1} parent=1 // pred_fallthru
      _
    // Predicated region
    $region26: #{tpu_custom_call.1} parent=1 // pred_check
      _
    $region27: #{tpu_custom_call.1} parent=1 // pred_check_branch
      %76 = sbr.rel (0) target = $region29
    $region28: #{tpu_custom_call.1} parent=1 // pred_region
      _
    $region29: #{tpu_custom_call.1} parent=1 // pred_fallthru
      _
    %77 = vsyncpa [#allocation3], 1
    %78 = vsyncpa [#allocation5], 1

</llo_original>
